<compile_context>
chip_gen: v6e
topology: v6e:2x2x1
jax: 0.10.0
libtpu: 0.0.40
codegen_flags: <defaults>
</compile_context>

<pallas_src>
import jax
import jax.numpy as jnp
from jax.experimental import pallas as pl
from jax.experimental.pallas import tpu as pltpu

HIDDEN = 256


def _round_up(n, m):
    return ((n + m - 1) // m) * m


def _pick_tile(batch, *, tm_max=1024, large_threshold=256, min_tiles_large=2):
    """Choose (tm, padded_batch).

    Small batches: one tile, rounded to the 8-row sublane granule.
    Large batches: at least 2 tiles (so v7x can use both TensorCores), tile
    sized to minimize padded-row waste (<= 8*n_tiles - 1 wasted rows).
    """
    batch = max(int(batch), 1)
    if batch <= large_threshold:
        tm = _round_up(batch, 8)
        n_tiles = 1
    else:
        n_tiles = max(min_tiles_large, pl.cdiv(batch, tm_max))
        tm = _round_up(pl.cdiv(batch, n_tiles), 8)
    return tm, n_tiles * tm


def actor_kernel(x_ref, w1_ref, b1_ref, w2_ref, b2_ref, w3_ref, b3_ref, o_ref):
    cd = w1_ref.dtype  # compute (MXU input) dtype, e.g. bfloat16

    # Layer 1: Linear + ReLU (bf16 MXU inputs, f32 accumulate/epilogue).
    h = jnp.dot(x_ref[...].astype(cd), w1_ref[...],
                preferred_element_type=jnp.float32)
    h = jnp.maximum(h + b1_ref[...], 0.0).astype(cd)  # fold cast into epilogue

    # Layer 2: Linear + ReLU.
    h = jnp.dot(h, w2_ref[...], preferred_element_type=jnp.float32)
    h = jnp.maximum(h + b2_ref[...], 0.0).astype(cd)

    # Layer 3: Linear + Tanh (tanh on the EUP in f32; narrow action_dim store).
    h = jnp.dot(h, w3_ref[...], preferred_element_type=jnp.float32)
    o_ref[...] = jnp.tanh(h + b3_ref[...])


def prepare_actor_params(params, compute_dtype=jnp.bfloat16):
    """One-time parameter prep (do this at init, NOT per forward call)."""
    return {
        "w1": params["w1"].astype(compute_dtype),
        "b1": params["b1"].astype(jnp.float32).reshape(1, -1),
        "w2": params["w2"].astype(compute_dtype),
        "b2": params["b2"].astype(jnp.float32).reshape(1, -1),
        "w3": params["w3"].astype(compute_dtype),
        "b3": params["b3"].astype(jnp.float32).reshape(1, -1),
    }


def actor_forward(x, prepped, *, tm_max=1024):
    """Fused 3-layer MLP in a single batch-tiled Pallas kernel.

    x: [batch, state_dim] float32
    prepped: output of prepare_actor_params
    returns: [batch, action_dim] float32
    """
    batch, state_dim = x.shape
    action_dim = prepped["w3"].shape[1]

    tm, b_pad = _pick_tile(batch, tm_max=tm_max)
    grid = (b_pad // tm,)

    # Pad only the batch axis, only when needed (rows are independent, padded
    # rows are sliced away below).
    if b_pad != batch:
        x_in = jnp.zeros((b_pad, state_dim), x.dtype).at[:batch].set(x)
    else:
        x_in = x

    out = pl.pallas_call(
        actor_kernel,
        out_shape=jax.ShapeDtypeStruct((b_pad, action_dim), jnp.float32),
        grid=grid,
        in_specs=[
            pl.BlockSpec((tm, state_dim), lambda i: (i, 0)),        # x: streamed
            pl.BlockSpec((state_dim, HIDDEN), lambda i: (0, 0)),    # w1: resident
            pl.BlockSpec((1, HIDDEN), lambda i: (0, 0)),            # b1
            pl.BlockSpec((HIDDEN, HIDDEN), lambda i: (0, 0)),       # w2
            pl.BlockSpec((1, HIDDEN), lambda i: (0, 0)),            # b2
            pl.BlockSpec((HIDDEN, action_dim), lambda i: (0, 0)),   # w3
            pl.BlockSpec((1, action_dim), lambda i: (0, 0)),        # b3
        ],
        out_specs=pl.BlockSpec((tm, action_dim), lambda i: (i, 0)),
        compiler_params=pltpu.CompilerParams(
            dimension_semantics=("parallel",),
            # Raises v5e's 16 MiB scoped default; within v6e/v7x defaults too.
            vmem_limit_bytes=32 * 1024 * 1024,
        ),
    )(x_in, prepped["w1"], prepped["b1"], prepped["w2"], prepped["b2"],
      prepped["w3"], prepped["b3"])

    return out[:batch] if b_pad != batch else out


def actor_reference(x, params, compute_dtype=jnp.bfloat16):
    """Plain-JAX reference using the same bf16-input / f32-accumulate math."""
    cd = compute_dtype
    h = jnp.dot(x.astype(cd), params["w1"].astype(cd),
                preferred_element_type=jnp.float32) + params["b1"]
    h = jnp.maximum(h, 0.0)
    h = jnp.dot(h.astype(cd), params["w2"].astype(cd),
                preferred_element_type=jnp.float32) + params["b2"]
    h = jnp.maximum(h, 0.0)
    h = jnp.dot(h.astype(cd), params["w3"].astype(cd),
                preferred_element_type=jnp.float32) + params["b3"]
    return jnp.tanh(h)


def actor_reference_f32(x, params):
    h = jnp.maximum(x @ params["w1"] + params["b1"], 0.0)
    h = jnp.maximum(h @ params["w2"] + params["b2"], 0.0)
    return jnp.tanh(h @ params["w3"] + params["b3"])


def init_actor_params(key, state_dim, action_dim, hidden=HIDDEN):
    """PyTorch-style init: U(-1/sqrt(fan_in), 1/sqrt(fan_in))."""
    ks = jax.random.split(key, 6)

    def lin(kw, kb, fan_in, fan_out):
        bound = 1.0 / jnp.sqrt(jnp.float32(fan_in))
        w = jax.random.uniform(kw, (fan_in, fan_out), jnp.float32, -bound, bound)
        b = jax.random.uniform(kb, (1, fan_out), jnp.float32, -bound, bound)
        return w, b

    w1, b1 = lin(ks[0], ks[1], state_dim, hidden)
    w2, b2 = lin(ks[2], ks[3], hidden, hidden)
    w3, b3 = lin(ks[4], ks[5], hidden, action_dim)
    return {"w1": w1, "b1": b1, "w2": w2, "b2": b2, "w3": w3, "b3": b3}


if __name__ == "__main__":
    # Small shapes consistent with the module: flattened Unity observation
    # vector -> continuous action vector.
    # TODO(synk): UnityEnvironment / training-loop plumbing is host-side and
    # has no Pallas equivalent; only the Actor forward pass is implemented.
    batch = 2
    state_dim = 32
    action_dim = 4

    key = jax.random.PRNGKey(0)
    k_x, k_p = jax.random.split(key)

    x = jax.random.normal(k_x, (batch, state_dim), dtype=jnp.float32)
    params = init_actor_params(k_p, state_dim, action_dim)
    prepped = prepare_actor_params(params)   # one-time weight cast (bf16)

    fwd = jax.jit(actor_forward)
    out = jax.block_until_ready(fwd(x, prepped))
    assert out.shape == (batch, action_dim)

    # Exact-math reference (same bf16 matmul inputs, f32 accumulation).
    ref_bf16 = actor_reference(x, params)
    assert jnp.allclose(out, ref_bf16, atol=2e-3, rtol=2e-3)

    # Sanity check against the full-f32 PyTorch-equivalent forward
    # (loose tolerance: bf16 MXU inputs vs f32).
    ref_f32 = actor_reference_f32(x, params)
    assert jnp.allclose(out, ref_f32, atol=5e-2, rtol=5e-2)

    print("KERNEL_OK")
</pallas_src>

<mosaic_0001>
module attributes {stable_mosaic.version = 11 : i64} {
  func.func @actor_kernel(%arg0: i32, %arg1: memref<8x32xf32, #tpu.memory_space<vmem>>, %arg2: memref<32x256xbf16, #tpu.memory_space<vmem>>, %arg3: memref<1x256xf32, #tpu.memory_space<vmem>>, %arg4: memref<256x256xbf16, #tpu.memory_space<vmem>>, %arg5: memref<1x256xf32, #tpu.memory_space<vmem>>, %arg6: memref<256x4xbf16, #tpu.memory_space<vmem>>, %arg7: memref<1x4xf32, #tpu.memory_space<vmem>>, %arg8: memref<8x4xf32, #tpu.memory_space<vmem>>) attributes {dimension_semantics = [#tpu.dimension_semantics<parallel>], iteration_bounds = array<i64: 1>, scalar_prefetch = 0 : i64, scratch_operands = 0 : i64, tpu.core_type = #tpu.core_type<tc>, window_params = [{transform_indices = @transform_0, window_bounds = array<i64: 8, 32>}, {pipeline_mode = #tpu.pipeline_mode<synchronous>, transform_indices = @transform_1, window_bounds = array<i64: 32, 256>}, {pipeline_mode = #tpu.pipeline_mode<synchronous>, transform_indices = @transform_2, window_bounds = array<i64: 1, 256>}, {pipeline_mode = #tpu.pipeline_mode<synchronous>, transform_indices = @transform_3, window_bounds = array<i64: 256, 256>}, {pipeline_mode = #tpu.pipeline_mode<synchronous>, transform_indices = @transform_4, window_bounds = array<i64: 1, 256>}, {pipeline_mode = #tpu.pipeline_mode<synchronous>, transform_indices = @transform_5, window_bounds = array<i64: 256, 4>}, {pipeline_mode = #tpu.pipeline_mode<synchronous>, transform_indices = @transform_6, window_bounds = array<i64: 1, 4>}, {transform_indices = @transform_7, window_bounds = array<i64: 8, 4>}]} {
    %c0 = arith.constant 0 : index
    %c0_0 = arith.constant 0 : index
    %0 = vector.load %arg1[%c0, %c0_0] : memref<8x32xf32, #tpu.memory_space<vmem>>, vector<8x32xf32>
    %1 = arith.truncf %0 : vector<8x32xf32> to vector<8x32xbf16>
    %c0_1 = arith.constant 0 : index
    %c0_2 = arith.constant 0 : index
    %2 = vector.load %arg2[%c0_1, %c0_2] : memref<32x256xbf16, #tpu.memory_space<vmem>>, vector<32x256xbf16>
    %cst = arith.constant dense<0.000000e+00> : vector<8x256xf32>
    %3 = tpu.matmul %1, %2, %cst {dimension_numbers = #tpu.dot_dimension_numbers<[1], [0], [0], [1], [0, 0, 1, 1], [], []>} : vector<8x32xbf16>, vector<32x256xbf16>, vector<8x256xf32> -> vector<8x256xf32>
    %c0_3 = arith.constant 0 : index
    %c0_4 = arith.constant 0 : index
    %4 = vector.load %arg3[%c0_3, %c0_4] : memref<1x256xf32, #tpu.memory_space<vmem>>, vector<1x256xf32>
    %5 = vector.broadcast %4 : vector<1x256xf32> to vector<8x256xf32>
    %6 = arith.addf %3, %5 : vector<8x256xf32>
    %cst_5 = arith.constant 0.000000e+00 : f32
    %7 = vector.broadcast %cst_5 : f32 to vector<8x256xf32>
    %8 = arith.maximumf %6, %7 : vector<8x256xf32>
    %9 = arith.truncf %8 : vector<8x256xf32> to vector<8x256xbf16>
    %c0_6 = arith.constant 0 : index
    %c0_7 = arith.constant 0 : index
    %10 = vector.load %arg4[%c0_6, %c0_7] : memref<256x256xbf16, #tpu.memory_space<vmem>>, vector<256x256xbf16>
    %cst_8 = arith.constant dense<0.000000e+00> : vector<8x256xf32>
    %11 = tpu.matmul %9, %10, %cst_8 {dimension_numbers = #tpu.dot_dimension_numbers<[1], [0], [0], [1], [0, 0, 1, 1], [], []>} : vector<8x256xbf16>, vector<256x256xbf16>, vector<8x256xf32> -> vector<8x256xf32>
    %c0_9 = arith.constant 0 : index
    %c0_10 = arith.constant 0 : index
    %12 = vector.load %arg5[%c0_9, %c0_10] : memref<1x256xf32, #tpu.memory_space<vmem>>, vector<1x256xf32>
    %13 = vector.broadcast %12 : vector<1x256xf32> to vector<8x256xf32>
    %14 = arith.addf %11, %13 : vector<8x256xf32>
    %cst_11 = arith.constant 0.000000e+00 : f32
    %15 = vector.broadcast %cst_11 : f32 to vector<8x256xf32>
    %16 = arith.maximumf %14, %15 : vector<8x256xf32>
    %17 = arith.truncf %16 : vector<8x256xf32> to vector<8x256xbf16>
    %c0_12 = arith.constant 0 : index
    %c0_13 = arith.constant 0 : index
    %18 = vector.load %arg6[%c0_12, %c0_13] : memref<256x4xbf16, #tpu.memory_space<vmem>>, vector<256x4xbf16>
    %cst_14 = arith.constant dense<0.000000e+00> : vector<8x4xf32>
    %19 = tpu.matmul %17, %18, %cst_14 {dimension_numbers = #tpu.dot_dimension_numbers<[1], [0], [0], [1], [0, 0, 1, 1], [], []>} : vector<8x256xbf16>, vector<256x4xbf16>, vector<8x4xf32> -> vector<8x4xf32>
    %c0_15 = arith.constant 0 : index
    %c0_16 = arith.constant 0 : index
    %20 = vector.load %arg7[%c0_15, %c0_16] : memref<1x4xf32, #tpu.memory_space<vmem>>, vector<1x4xf32>
    %21 = vector.broadcast %20 : vector<1x4xf32> to vector<8x4xf32>
    %22 = arith.addf %19, %21 : vector<8x4xf32>
    %23 = math.tanh %22 : vector<8x4xf32>
    %c0_17 = arith.constant 0 : index
    %c0_18 = arith.constant 0 : index
    %24 = vector.load %arg8[%c0_17, %c0_18] : memref<8x4xf32, #tpu.memory_space<vmem>>, vector<8x4xf32>
    tpu.vector_store %arg8[%c0_17, %c0_18], %23 {strides = array<i32>} : memref<8x4xf32, #tpu.memory_space<vmem>>, vector<8x4xf32>,
    return
  }
  func.func @transform_0(%arg0: i32) -> (i32, i32) {
    %c0_i32 = arith.constant 0 : i32
    %c0_i32_0 = arith.constant 0 : i32
    return %arg0, %c0_i32 : i32, i32
  }
  func.func @transform_1(%arg0: i32) -> (i32, i32) {
    %c0_i32 = arith.constant 0 : i32
    %c0_i32_0 = arith.constant 0 : i32
    %c0_i32_1 = arith.constant 0 : i32
    return %c0_i32, %c0_i32_0 : i32, i32
  }
  func.func @transform_2(%arg0: i32) -> (i32, i32) {
    %c0_i32 = arith.constant 0 : i32
    %c0_i32_0 = arith.constant 0 : i32
    %c0_i32_1 = arith.constant 0 : i32
    return %c0_i32, %c0_i32_0 : i32, i32
  }
  func.func @transform_3(%arg0: i32) -> (i32, i32) {
    %c0_i32 = arith.constant 0 : i32
    %c0_i32_0 = arith.constant 0 : i32
    %c0_i32_1 = arith.constant 0 : i32
    return %c0_i32, %c0_i32_0 : i32, i32
  }
  func.func @transform_4(%arg0: i32) -> (i32, i32) {
    %c0_i32 = arith.constant 0 : i32
    %c0_i32_0 = arith.constant 0 : i32
    %c0_i32_1 = arith.constant 0 : i32
    return %c0_i32, %c0_i32_0 : i32, i32
  }
  func.func @transform_5(%arg0: i32) -> (i32, i32) {
    %c0_i32 = arith.constant 0 : i32
    %c0_i32_0 = arith.constant 0 : i32
    %c0_i32_1 = arith.constant 0 : i32
    return %c0_i32, %c0_i32_0 : i32, i32
  }
  func.func @transform_6(%arg0: i32) -> (i32, i32) {
    %c0_i32 = arith.constant 0 : i32
    %c0_i32_0 = arith.constant 0 : i32
    %c0_i32_1 = arith.constant 0 : i32
    return %c0_i32, %c0_i32_0 : i32, i32
  }
  func.func @transform_7(%arg0: i32) -> (i32, i32) {
    %c0_i32 = arith.constant 0 : i32
    %c0_i32_0 = arith.constant 0 : i32
    return %arg0, %c0_i32 : i32, i32
  }
}

</mosaic_0001>

<llo_original>
// kernel: actor_forward.1
$region0: #{actor_forward.1}
  #allocation0 [shape = 'u32[]', space=smem, size = 0x4, offset = 0x4, fixed_abs, tag = 'smem constant byte address 0x4 - core index']
  #allocation1 [shape = 'u32[144,128]{1,0:T(1,128)}', space=vmem, size = 0x12000, scoped, tag = 'internal scratch']
  %s0 = inlined_call_operand.vmem [shape: f32[8,32], index: 0, kind: input, shape index: {}]
  %s1 = inlined_call_operand.vmem [shape: bf16[32,256], index: 1, kind: input, shape index: {}]
  %s2 = inlined_call_operand.vmem [shape: f32[1,256], index: 2, kind: input, shape index: {}]
  %s3 = inlined_call_operand.hbm [shape: bf16[256,256], index: 3, kind: input, shape index: {}]
  %s4 = inlined_call_operand.vmem [shape: f32[1,256], index: 4, kind: input, shape index: {}]
  %s5 = inlined_call_operand.vmem [shape: bf16[256,4], index: 5, kind: input, shape index: {}]
  %s6 = inlined_call_operand.vmem [shape: f32[1,4], index: 6, kind: input, shape index: {}]
  %s7 = inlined_call_operand.vmem [shape: f32[8,4], index: 7, kind: output, shape index: {}]
  %s8 = sld [smem:[#allocation0]]
  $region42: #{actor_forward.1} parent=0
    _
  %s10 = ssub.s32 1, %s8
  %s11 = scalar_select 0, %s10, %s8
  $region1: #{actor_forward.1} parent=0
    #allocation2 [shape = 'u8[131072]{0}', space=vmem, size = 0x20000, scoped, tag = 'input window, operand 3, single buffered']
    #allocation3 [shape = 's32[1]{0}', space=sflag, size = 0x4, scoped, tag = 'scoped memory for actor_forward.1']
    %12 = vsyncpa [#allocation3], 0
    // Predicated region
    $region2: #{actor_forward.1} parent=1 // pred_check
      _
    $region3: #{actor_forward.1} parent=1 // pred_check_branch
      %14 = sbr.rel (0) target = $region5
    $region4: #{actor_forward.1} parent=1 // pred_region
      _
    $region5: #{actor_forward.1} parent=1 // pred_fallthru
      _
    // Predicated region
    $region6: #{actor_forward.1} parent=1 // pred_check
      _
    $region7: #{actor_forward.1} parent=1 // pred_check_branch
      %16 = sbr.rel (0) target = $region9
    $region8: #{actor_forward.1} parent=1 // pred_region
      _
    $region9: #{actor_forward.1} parent=1 // pred_fallthru
      _
    // Predicated region
    $region10: #{actor_forward.1} parent=1 // pred_check
      _
    $region11: #{actor_forward.1} parent=1 // pred_check_branch
      %18 = sbr.rel (0) target = $region13
    $region12: #{actor_forward.1} parent=1 // pred_region
      _
    $region13: #{actor_forward.1} parent=1 // pred_fallthru
      _
    // Predicated region
    $region14: #{actor_forward.1} parent=1 // pred_check
      _
    $region15: #{actor_forward.1} parent=1 // pred_check_branch
      %20 = sbr.rel (0) target = $region17
    $region16: #{actor_forward.1} parent=1 // pred_region
      %s22 = ssub.s32 4096, 4096
      %23 = vsyncadd [#allocation3], %s22
      %s24 = sshll.u32 [#allocation2], 4
      %s25 = int_to_ptr.vmem [resolvable:$true] %s24
      %30 = dma.hbm_to_vmem [thread:$0]  %s3, 4096, %s25, [#allocation3], 128, 128, 8
    $region17: #{actor_forward.1} parent=1 // pred_fallthru
      _
    // Predicated region
    $region18: #{actor_forward.1} parent=1 // pred_check
      _
    $region19: #{actor_forward.1} parent=1 // pred_check_branch
      %32 = sbr.rel (0) target = $region21
    $region20: #{actor_forward.1} parent=1 // pred_region
      _
    $region21: #{actor_forward.1} parent=1 // pred_fallthru
      _
    // Predicated region
    $region22: #{actor_forward.1} parent=1 // pred_check
      _
    $region23: #{actor_forward.1} parent=1 // pred_check_branch
      %34 = sbr.rel (0) target = $region25
    $region24: #{actor_forward.1} parent=1 // pred_region
      _
    $region25: #{actor_forward.1} parent=1 // pred_fallthru
      _
    // Predicated region
    $region26: #{actor_forward.1} parent=1 // pred_check
      _
    $region27: #{actor_forward.1} parent=1 // pred_check_branch
      %36 = sbr.rel (0) target = $region29
    $region28: #{actor_forward.1} parent=1 // pred_region
      _
    $region29: #{actor_forward.1} parent=1 // pred_fallthru
      _
    // Predicated region
    $region30: #{actor_forward.1} parent=1 // pred_check
      _
    $region31: #{actor_forward.1} parent=1 // pred_check_branch
      %38 = sbr.rel (0) target = $region33
    $region32: #{actor_forward.1} parent=1 // pred_region
      %39 = dma.done [#allocation3], 4096
    $region33: #{actor_forward.1} parent=1 // pred_fallthru
      _
    %v41 = vld [vmem:[%s0] sm:$0xff]
    %v42 = vpack.c.bf16 %v41, %v41
    %v43 = vld [vmem:[%s1] sm:$0xff]
    %v44 = vld [vmem:[%s1 + $0x8] sm:$0xff]
    %v45 = vld [vmem:[%s1 + $0x10] sm:$0xff]
    %v46 = vld [vmem:[%s1 + $0x18] sm:$0xff]
    %v47 = vld [vmem:[%s2] sm:$0x3]
    %v49 = vlaneseq
    %v50 = vshrl.u32 %v49, 7
    %v51 = vsub.s32 0, %v50
    %v52 = vrot.slane %v47, %v51
    %v53 = vlaneseq
    %v54 = vshrl.u32 %v53, 7
    %v55 = vsub.s32 1, %v54
    %v56 = vrot.slane %v47, %v55
    %v63 = vunpack.c.l.b16 %v43
    %v64 = vunpack.c.h.b16 %v43
    %v65 = vunpack.c.l.b16 %v44
    %v66 = vunpack.c.h.b16 %v44
    %v67 = vunpack.c.l.b16 %v45
    %v68 = vunpack.c.h.b16 %v45
    %v69 = vunpack.c.l.b16 %v46
    %v70 = vunpack.c.h.b16 %v46
    %v71 = vpack.c.b16 %v65, %v63
    %v72 = vpack.c.b16 %v66, %v64
    %v73 = vpack.c.b16 %v69, %v67
    %v74 = vpack.c.b16 %v70, %v68
    %vm79 = vcmask 261120
    %v81 = vsel %vm79, %v42, 0
    %83 = vmatprep.subr.bf16.mxu0 0
    %84 = vmatpush1.bf16.msra.mxu0 0
    %85 = vmatprep.subr.bf16.mxu0 0
    %86 = vmatpush1.bf16.msra.mxu0 0
    %87 = vmatprep.subr.bf16.mxu0 0
    %88 = vmatpush1.bf16.msra.mxu0 0
    %89 = vmatprep.subr.bf16.mxu0 0
    %90 = vmatpush1.bf16.msra.mxu0 0
    %91 = vmatprep.subr.bf16.mxu0 0
    %92 = vmatpush1.bf16.msra.mxu0 0
    %93 = vmatprep.subr.bf16.mxu0 0
    %94 = vmatpush1.bf16.msra.mxu0 0
    %95 = vmatprep.subr.bf16.mxu0 %v74
    %96 = vmatpush1.bf16.msra.mxu0 %v73
    %97 = vmatprep.subr.bf16.mxu0 %v72
    %98 = vmatpush1.bf16.msra.mxu0 %v71
    %99 = vmatprep.subr.bf16.mxu0 0
    %100 = vmatpush2.bf16.msra.mxu0 0
    %101 = vmatprep.subr.bf16.mxu0 0
    %102 = vmatpush2.bf16.msra.mxu0 0
    %103 = vmatprep.subr.bf16.mxu0 0
    %104 = vmatpush2.bf16.msra.mxu0 0
    %105 = vmatprep.subr.bf16.mxu0 0
    %106 = vmatpush2.bf16.msra.mxu0 0
    %107 = vmatprep.subr.bf16.mxu0 0
    %108 = vmatpush2.bf16.msra.mxu0 0
    %109 = vmatprep.subr.bf16.mxu0 0
    %110 = vmatpush2.bf16.msra.mxu0 0
    %111 = vmatprep.subr.bf16.mxu0 0
    %112 = vmatpush2.bf16.msra.mxu0 0
    %113 = vmatprep.subr.bf16.mxu0 0
    %114 = vmatpush2.bf16.msra.mxu0 0
    %115 = vmatprep.mubr.bf16.mxu0 0
    %116 = vmatmul.mubr.bf16.gmra.mxu0 %v81
    %v117 = vpop.f32.mrf.mxu0
    %v118 = vadd.f32 %v52, %v117
    %v119 = vpop.f32.mrf.mxu0
    %v120 = vadd.f32 %v56, %v119
    %v121 = vpop.f32.mrf.mxu0
    %v122 = vpop.f32.mrf.mxu0
    %123 = vdwg.mxu0
    %v124 = vmax.f32 %v118, 0.0
    %v125 = vmax.f32 %v120, 0.0
    %v126 = vpack.c.bf16 %v124, %v124
    %v127 = vpack.c.bf16 %v125, %v125
    %v128 = vld [vmem:[#allocation2] sm:$0xff]
    %v129 = vld [vmem:[#allocation2 + $0x8] sm:$0xff]
    %v130 = vld [vmem:[#allocation2 + $0x10] sm:$0xff]
    %v131 = vld [vmem:[#allocation2 + $0x18] sm:$0xff]
    %v132 = vld [vmem:[#allocation2 + $0x20] sm:$0xff]
    %v133 = vld [vmem:[#allocation2 + $0x28] sm:$0xff]
    %v134 = vld [vmem:[#allocation2 + $0x30] sm:$0xff]
    %v135 = vld [vmem:[#allocation2 + $0x38] sm:$0xff]
    %v136 = vld [vmem:[#allocation2 + $0x40] sm:$0xff]
    %v137 = vld [vmem:[#allocation2 + $0x48] sm:$0xff]
    %v138 = vld [vmem:[#allocation2 + $0x50] sm:$0xff]
    %v139 = vld [vmem:[#allocation2 + $0x58] sm:$0xff]
    %v140 = vld [vmem:[#allocation2 + $0x60] sm:$0xff]
    %v141 = vld [vmem:[#allocation2 + $0x68] sm:$0xff]
    %v142 = vld [vmem:[#allocation2 + $0x70] sm:$0xff]
    %v143 = vld [vmem:[#allocation2 + $0x78] sm:$0xff]
    %v144 = vld [vmem:[#allocation2 + $0x80] sm:$0xff]
    %v145 = vld [vmem:[#allocation2 + $0x88] sm:$0xff]
    %v146 = vld [vmem:[#allocation2 + $0x90] sm:$0xff]
    %v147 = vld [vmem:[#allocation2 + $0x98] sm:$0xff]
    %v148 = vld [vmem:[#allocation2 + $0xa0] sm:$0xff]
    %v149 = vld [vmem:[#allocation2 + $0xa8] sm:$0xff]
    %v150 = vld [vmem:[#allocation2 + $0xb0] sm:$0xff]
    %v151 = vld [vmem:[#allocation2 + $0xb8] sm:$0xff]
    %v152 = vld [vmem:[#allocation2 + $0xc0] sm:$0xff]
    %v153 = vld [vmem:[#allocation2 + $0xc8] sm:$0xff]
    %v154 = vld [vmem:[#allocation2 + $0xd0] sm:$0xff]
    %v155 = vld [vmem:[#allocation2 + $0xd8] sm:$0xff]
    %v156 = vld [vmem:[#allocation2 + $0xe0] sm:$0xff]
    %v157 = vld [vmem:[#allocation2 + $0xe8] sm:$0xff]
    %v158 = vld [vmem:[#allocation2 + $0xf0] sm:$0xff]
    %v159 = vld [vmem:[#allocation2 + $0xf8] sm:$0xff]
    %v160 = vld [vmem:[%s4] sm:$0x3]
    %v162 = vlaneseq
    %v163 = vshrl.u32 %v162, 7
    %v164 = vsub.s32 0, %v163
    %v165 = vrot.slane %v160, %v164
    %v166 = vlaneseq
    %v167 = vshrl.u32 %v166, 7
    %v168 = vsub.s32 1, %v167
    %v169 = vrot.slane %v160, %v168
    %v204 = vunpack.c.l.b16 %v128
    %v205 = vunpack.c.h.b16 %v128
    %v206 = vunpack.c.l.b16 %v129
    %v207 = vunpack.c.h.b16 %v129
    %v208 = vunpack.c.l.b16 %v130
    %v209 = vunpack.c.h.b16 %v130
    %v210 = vunpack.c.l.b16 %v131
    %v211 = vunpack.c.h.b16 %v131
    %v212 = vunpack.c.l.b16 %v132
    %v213 = vunpack.c.h.b16 %v132
    %v214 = vunpack.c.l.b16 %v133
    %v215 = vunpack.c.h.b16 %v133
    %v216 = vunpack.c.l.b16 %v134
    %v217 = vunpack.c.h.b16 %v134
    %v218 = vunpack.c.l.b16 %v135
    %v219 = vunpack.c.h.b16 %v135
    %v220 = vunpack.c.l.b16 %v136
    %v221 = vunpack.c.h.b16 %v136
    %v222 = vunpack.c.l.b16 %v137
    %v223 = vunpack.c.h.b16 %v137
    %v224 = vunpack.c.l.b16 %v138
    %v225 = vunpack.c.h.b16 %v138
    %v226 = vunpack.c.l.b16 %v139
    %v227 = vunpack.c.h.b16 %v139
    %v228 = vunpack.c.l.b16 %v140
    %v229 = vunpack.c.h.b16 %v140
    %v230 = vunpack.c.l.b16 %v141
    %v231 = vunpack.c.h.b16 %v141
    %v232 = vunpack.c.l.b16 %v142
    %v233 = vunpack.c.h.b16 %v142
    %v234 = vunpack.c.l.b16 %v143
    %v235 = vunpack.c.h.b16 %v143
    %v236 = vunpack.c.l.b16 %v144
    %v237 = vunpack.c.h.b16 %v144
    %v238 = vunpack.c.l.b16 %v145
    %v239 = vunpack.c.h.b16 %v145
    %v240 = vunpack.c.l.b16 %v146
    %v241 = vunpack.c.h.b16 %v146
    %v242 = vunpack.c.l.b16 %v147
    %v243 = vunpack.c.h.b16 %v147
    %v244 = vunpack.c.l.b16 %v148
    %v245 = vunpack.c.h.b16 %v148
    %v246 = vunpack.c.l.b16 %v149
    %v247 = vunpack.c.h.b16 %v149
    %v248 = vunpack.c.l.b16 %v150
    %v249 = vunpack.c.h.b16 %v150
    %v250 = vunpack.c.l.b16 %v151
    %v251 = vunpack.c.h.b16 %v151
    %v252 = vunpack.c.l.b16 %v152
    %v253 = vunpack.c.h.b16 %v152
    %v254 = vunpack.c.l.b16 %v153
    %v255 = vunpack.c.h.b16 %v153
    %v256 = vunpack.c.l.b16 %v154
    %v257 = vunpack.c.h.b16 %v154
    %v258 = vunpack.c.l.b16 %v155
    %v259 = vunpack.c.h.b16 %v155
    %v260 = vunpack.c.l.b16 %v156
    %v261 = vunpack.c.h.b16 %v156
    %v262 = vunpack.c.l.b16 %v157
    %v263 = vunpack.c.h.b16 %v157
    %v264 = vunpack.c.l.b16 %v158
    %v265 = vunpack.c.h.b16 %v158
    %v266 = vunpack.c.l.b16 %v159
    %v267 = vunpack.c.h.b16 %v159
    %v268 = vpack.c.b16 %v206, %v204
    %v269 = vpack.c.b16 %v207, %v205
    %v270 = vpack.c.b16 %v210, %v208
    %v271 = vpack.c.b16 %v211, %v209
    %v272 = vpack.c.b16 %v214, %v212
    %v273 = vpack.c.b16 %v215, %v213
    %v274 = vpack.c.b16 %v218, %v216
    %v275 = vpack.c.b16 %v219, %v217
    %v276 = vpack.c.b16 %v222, %v220
    %v277 = vpack.c.b16 %v223, %v221
    %v278 = vpack.c.b16 %v226, %v224
    %v279 = vpack.c.b16 %v227, %v225
    %v280 = vpack.c.b16 %v230, %v228
    %v281 = vpack.c.b16 %v231, %v229
    %v282 = vpack.c.b16 %v234, %v232
    %v283 = vpack.c.b16 %v235, %v233
    %v284 = vpack.c.b16 %v238, %v236
    %v285 = vpack.c.b16 %v239, %v237
    %v286 = vpack.c.b16 %v242, %v240
    %v287 = vpack.c.b16 %v243, %v241
    %v288 = vpack.c.b16 %v246, %v244
    %v289 = vpack.c.b16 %v247, %v245
    %v290 = vpack.c.b16 %v250, %v248
    %v291 = vpack.c.b16 %v251, %v249
    %v292 = vpack.c.b16 %v254, %v252
    %v293 = vpack.c.b16 %v255, %v253
    %v294 = vpack.c.b16 %v258, %v256
    %v295 = vpack.c.b16 %v259, %v257
    %v296 = vpack.c.b16 %v262, %v260
    %v297 = vpack.c.b16 %v263, %v261
    %v298 = vpack.c.b16 %v266, %v264
    %v299 = vpack.c.b16 %v267, %v265
    %332 = vmatprep.subr.bf16.mxu0 %v283
    %333 = vmatpush1.bf16.msra.mxu0 %v282
    %334 = vmatprep.subr.bf16.mxu0 %v281
    %335 = vmatpush1.bf16.msra.mxu0 %v280
    %336 = vmatprep.subr.bf16.mxu0 %v279
    %337 = vmatpush1.bf16.msra.mxu0 %v278
    %338 = vmatprep.subr.bf16.mxu0 %v277
    %339 = vmatpush1.bf16.msra.mxu0 %v276
    %340 = vmatprep.subr.bf16.mxu0 %v275
    %341 = vmatpush1.bf16.msra.mxu0 %v274
    %342 = vmatprep.subr.bf16.mxu0 %v273
    %343 = vmatpush1.bf16.msra.mxu0 %v272
    %344 = vmatprep.subr.bf16.mxu0 %v271
    %345 = vmatpush1.bf16.msra.mxu0 %v270
    %346 = vmatprep.subr.bf16.mxu0 %v269
    %347 = vmatpush1.bf16.msra.mxu0 %v268
    %348 = vmatprep.subr.bf16.mxu0 %v299
    %349 = vmatpush2.bf16.msra.mxu0 %v298
    %350 = vmatprep.subr.bf16.mxu0 %v297
    %351 = vmatpush2.bf16.msra.mxu0 %v296
    %352 = vmatprep.subr.bf16.mxu0 %v295
    %353 = vmatpush2.bf16.msra.mxu0 %v294
    %354 = vmatprep.subr.bf16.mxu0 %v293
    %355 = vmatpush2.bf16.msra.mxu0 %v292
    %356 = vmatprep.subr.bf16.mxu0 %v291
    %357 = vmatpush2.bf16.msra.mxu0 %v290
    %358 = vmatprep.subr.bf16.mxu0 %v289
    %359 = vmatpush2.bf16.msra.mxu0 %v288
    %360 = vmatprep.subr.bf16.mxu0 %v287
    %361 = vmatpush2.bf16.msra.mxu0 %v286
    %362 = vmatprep.subr.bf16.mxu0 %v285
    %363 = vmatpush2.bf16.msra.mxu0 %v284
    %364 = vmatprep.mubr.bf16.mxu0 %v127
    %365 = vmatmul.mubr.bf16.gmra.mxu0 %v126
    %v366 = vpop.f32.mrf.mxu0
    %v367 = vadd.f32 %v165, %v366
    %v368 = vpop.f32.mrf.mxu0
    %v369 = vadd.f32 %v169, %v368
    %v370 = vpop.f32.mrf.mxu0
    %v371 = vpop.f32.mrf.mxu0
    %372 = vdwg.mxu0
    %v373 = vmax.f32 %v367, 0.0
    %v374 = vmax.f32 %v369, 0.0
    %v375 = vpack.c.bf16 %v373, %v373
    %v376 = vpack.c.bf16 %v374, %v374
    %v377 = vld [vmem:[%s5] sm:$0xf]
    %v378 = vld [vmem:[%s5 + $0x4] sm:$0xf]
    %v379 = vld [vmem:[%s5 + $0x8] sm:$0xf]
    %v380 = vld [vmem:[%s5 + $0xc] sm:$0xf]
    %v381 = vld [vmem:[%s5 + $0x10] sm:$0xf]
    %v382 = vld [vmem:[%s5 + $0x14] sm:$0xf]
    %v383 = vld [vmem:[%s5 + $0x18] sm:$0xf]
    %v384 = vld [vmem:[%s5 + $0x1c] sm:$0xf]
    %v385 = vld [vmem:[%s5 + $0x20] sm:$0xf]
    %v386 = vld [vmem:[%s5 + $0x24] sm:$0xf]
    %v387 = vld [vmem:[%s5 + $0x28] sm:$0xf]
    %v388 = vld [vmem:[%s5 + $0x2c] sm:$0xf]
    %v389 = vld [vmem:[%s5 + $0x30] sm:$0xf]
    %v390 = vld [vmem:[%s5 + $0x34] sm:$0xf]
    %v391 = vld [vmem:[%s5 + $0x38] sm:$0xf]
    %v392 = vld [vmem:[%s5 + $0x3c] sm:$0xf]
    %v393 = vld [vmem:[%s5 + $0x40] sm:$0xf]
    %v394 = vld [vmem:[%s5 + $0x44] sm:$0xf]
    %v395 = vld [vmem:[%s5 + $0x48] sm:$0xf]
    %v396 = vld [vmem:[%s5 + $0x4c] sm:$0xf]
    %v397 = vld [vmem:[%s5 + $0x50] sm:$0xf]
    %v398 = vld [vmem:[%s5 + $0x54] sm:$0xf]
    %v399 = vld [vmem:[%s5 + $0x58] sm:$0xf]
    %v400 = vld [vmem:[%s5 + $0x5c] sm:$0xf]
    %v401 = vld [vmem:[%s5 + $0x60] sm:$0xf]
    %v402 = vld [vmem:[%s5 + $0x64] sm:$0xf]
    %v403 = vld [vmem:[%s5 + $0x68] sm:$0xf]
    %v404 = vld [vmem:[%s5 + $0x6c] sm:$0xf]
    %v405 = vld [vmem:[%s5 + $0x70] sm:$0xf]
    %v406 = vld [vmem:[%s5 + $0x74] sm:$0xf]
    %v407 = vld [vmem:[%s5 + $0x78] sm:$0xf]
    %v408 = vld [vmem:[%s5 + $0x7c] sm:$0xf]
    %v409 = vld [vmem:[%s6] sm:$0x1]
    %v411 = vlaneseq
    %v412 = vshrl.u32 %v411, 7
    %v413 = vsub.s32 0, %v412
    %v414 = vrot.slane %v409, %v413
    %v448 = vunpack.c.l.b16 %v377
    %v449 = vunpack.c.l.b16 %v378
    %v450 = vunpack.c.l.b16 %v379
    %v451 = vunpack.c.l.b16 %v380
    %v452 = vunpack.c.l.b16 %v381
    %v453 = vunpack.c.l.b16 %v382
    %v454 = vunpack.c.l.b16 %v383
    %v455 = vunpack.c.l.b16 %v384
    %v456 = vunpack.c.l.b16 %v385
    %v457 = vunpack.c.l.b16 %v386
    %v458 = vunpack.c.l.b16 %v387
    %v459 = vunpack.c.l.b16 %v388
    %v460 = vunpack.c.l.b16 %v389
    %v461 = vunpack.c.l.b16 %v390
    %v462 = vunpack.c.l.b16 %v391
    %v463 = vunpack.c.l.b16 %v392
    %v464 = vunpack.c.l.b16 %v393
    %v465 = vunpack.c.l.b16 %v394
    %v466 = vunpack.c.l.b16 %v395
    %v467 = vunpack.c.l.b16 %v396
    %v468 = vunpack.c.l.b16 %v397
    %v469 = vunpack.c.l.b16 %v398
    %v470 = vunpack.c.l.b16 %v399
    %v471 = vunpack.c.l.b16 %v400
    %v472 = vunpack.c.l.b16 %v401
    %v473 = vunpack.c.l.b16 %v402
    %v474 = vunpack.c.l.b16 %v403
    %v475 = vunpack.c.l.b16 %v404
    %v476 = vunpack.c.l.b16 %v405
    %v477 = vunpack.c.l.b16 %v406
    %v478 = vunpack.c.l.b16 %v407
    %v479 = vunpack.c.l.b16 %v408
    %v480 = vpack.c.b16 %v449, %v448
    %v481 = vpack.c.b16 %v451, %v450
    %v482 = vpack.c.b16 %v453, %v452
    %v483 = vpack.c.b16 %v455, %v454
    %v484 = vpack.c.b16 %v457, %v456
    %v485 = vpack.c.b16 %v459, %v458
    %v486 = vpack.c.b16 %v461, %v460
    %v487 = vpack.c.b16 %v463, %v462
    %v488 = vpack.c.b16 %v465, %v464
    %v489 = vpack.c.b16 %v467, %v466
    %v490 = vpack.c.b16 %v469, %v468
    %v491 = vpack.c.b16 %v471, %v470
    %v492 = vpack.c.b16 %v473, %v472
    %v493 = vpack.c.b16 %v475, %v474
    %v494 = vpack.c.b16 %v477, %v476
    %v495 = vpack.c.b16 %v479, %v478
    %512 = vmatprep.subr.bf16.mxu0 0
    %513 = vmatpush1.bf16.msra.mxu0 %v487
    %514 = vmatprep.subr.bf16.mxu0 0
    %515 = vmatpush1.bf16.msra.mxu0 %v486
    %516 = vmatprep.subr.bf16.mxu0 0
    %517 = vmatpush1.bf16.msra.mxu0 %v485
    %518 = vmatprep.subr.bf16.mxu0 0
    %519 = vmatpush1.bf16.msra.mxu0 %v484
    %520 = vmatprep.subr.bf16.mxu0 0
    %521 = vmatpush1.bf16.msra.mxu0 %v483
    %522 = vmatprep.subr.bf16.mxu0 0
    %523 = vmatpush1.bf16.msra.mxu0 %v482
    %524 = vmatprep.subr.bf16.mxu0 0
    %525 = vmatpush1.bf16.msra.mxu0 %v481
    %526 = vmatprep.subr.bf16.mxu0 0
    %527 = vmatpush1.bf16.msra.mxu0 %v480
    %528 = vmatprep.subr.bf16.mxu0 0
    %529 = vmatpush2.bf16.msra.mxu0 %v495
    %530 = vmatprep.subr.bf16.mxu0 0
    %531 = vmatpush2.bf16.msra.mxu0 %v494
    %532 = vmatprep.subr.bf16.mxu0 0
    %533 = vmatpush2.bf16.msra.mxu0 %v493
    %534 = vmatprep.subr.bf16.mxu0 0
    %535 = vmatpush2.bf16.msra.mxu0 %v492
    %536 = vmatprep.subr.bf16.mxu0 0
    %537 = vmatpush2.bf16.msra.mxu0 %v491
    %538 = vmatprep.subr.bf16.mxu0 0
    %539 = vmatpush2.bf16.msra.mxu0 %v490
    %540 = vmatprep.subr.bf16.mxu0 0
    %541 = vmatpush2.bf16.msra.mxu0 %v489
    %542 = vmatprep.subr.bf16.mxu0 0
    %543 = vmatpush2.bf16.msra.mxu0 %v488
    %544 = vmatprep.mubr.bf16.mxu0 %v376
    %545 = vmatmul.mubr.bf16.gmra.mxu0 %v375
    %v546 = vpop.f32.mrf.mxu0
    %v547 = vadd.f32 %v414, %v546
    %v548 = vpop.f32.mrf.mxu0
    %v549 = vpop.f32.mrf.mxu0
    %v550 = vpop.f32.mrf.mxu0
    %551 = vdwg.mxu0
    %v552 = vtanh.pop %v547
    %vm553 = vcmask 31744
    %554 = vst.msk [vmem:[%s7] sm:$0xff] %vm553, %v552
    // Predicated region
    $region34: #{actor_forward.1} parent=1 // pred_check
      _
    $region35: #{actor_forward.1} parent=1 // pred_check_branch
      %556 = sbr.rel (0) target = $region37
    $region36: #{actor_forward.1} parent=1 // pred_region
      _
    $region37: #{actor_forward.1} parent=1 // pred_fallthru
      _
    // Predicated region
    $region38: #{actor_forward.1} parent=1 // pred_check
      _
    $region39: #{actor_forward.1} parent=1 // pred_check_branch
      %558 = sbr.rel (0) target = $region41
    $region40: #{actor_forward.1} parent=1 // pred_region
      _
    $region41: #{actor_forward.1} parent=1 // pred_fallthru
      _
    %559 = vsyncpa [#allocation3], 1

</llo_original>
